<compile_context>
chip_gen: v7x
topology: tpu7x:2x2x1
jax: 0.10.0
libtpu: 0.0.40
codegen_flags: <defaults>
</compile_context>

<pallas_src>
import math
from functools import partial

import numpy as np
import jax
import jax.numpy as jnp
from jax import lax
from jax.experimental import pallas as pl
from jax.experimental.pallas import tpu as pltpu

LOG2 = math.log(2.0)


def _round_up(x, m):
    return ((x + m - 1) // m) * m


# ----------------------------------------------------------------------------
# Kernel 1: force_predictor MLP over edges (Linear+ShiftedSoftplus ... Linear(d,1))
# ----------------------------------------------------------------------------
def _shifted_softplus(x):
    # softplus(x) - log(2), numerically stable (EUP: exp + log)
    return jnp.maximum(x, 0.0) + jnp.log(1.0 + jnp.exp(-jnp.abs(x))) - LOG2


def _make_mlp_kernel(n_hidden):
    # refs: x, (w_i, b_i) * n_hidden, w_last_row(1,d_last), b_last(1,1), out(tile_e,1)
    def kernel(*refs):
        x_ref = refs[0]
        o_ref = refs[-1]
        h = x_ref[...]
        for i in range(n_hidden):
            w = refs[1 + 2 * i][...]
            b = refs[2 + 2 * i][...]
            h = jnp.dot(h, w, preferred_element_type=jnp.float32) + b
            h = _shifted_softplus(h)
        # Final Linear(d_last, 1) as a lane reduction -> (tile_e, 1), no lane padding.
        w_last = refs[1 + 2 * n_hidden][...]   # (1, d_last)
        b_last = refs[2 + 2 * n_hidden][...]   # (1, 1)
        out = jnp.sum(h * w_last, axis=-1, keepdims=True) + b_last
        o_ref[...] = out.astype(o_ref.dtype)
    return kernel


def mlp_forward(x, weights, biases, tile_e=512):
    """Apply the Linear/ShiftedSoftplus stack to [E, D0] edge embeddings -> [E, 1]."""
    E, d0 = x.shape
    n_layers = len(weights)
    n_hidden = n_layers - 1

    tile_e = min(tile_e, _round_up(E, 8))
    E_pad = _round_up(E, tile_e)
    x_p = jnp.zeros((E_pad, d0), jnp.float32).at[:E].set(x.astype(jnp.float32))

    in_specs = [pl.BlockSpec((tile_e, d0), lambda i: (i, 0))]
    args = [x_p]
    for w, b in zip(weights[:n_hidden], biases[:n_hidden]):
        din, dout = w.shape
        in_specs.append(pl.BlockSpec((din, dout), lambda i: (0, 0)))
        in_specs.append(pl.BlockSpec((1, dout), lambda i: (0, 0)))
        args.append(w.astype(jnp.float32))
        args.append(b.reshape(1, -1).astype(jnp.float32))

    w_last, b_last = weights[-1], biases[-1]
    d_last = w_last.shape[0]
    in_specs.append(pl.BlockSpec((1, d_last), lambda i: (0, 0)))
    in_specs.append(pl.BlockSpec((1, 1), lambda i: (0, 0)))
    args.append(w_last.reshape(1, d_last).astype(jnp.float32))
    args.append(b_last.reshape(1, 1).astype(jnp.float32))

    out = pl.pallas_call(
        _make_mlp_kernel(n_hidden),
        out_shape=jax.ShapeDtypeStruct((E_pad, 1), jnp.float32),
        grid=(E_pad // tile_e,),
        in_specs=in_specs,
        out_specs=pl.BlockSpec((tile_e, 1), lambda i: (i, 0)),
        compiler_params=pltpu.CompilerParams(dimension_semantics=("parallel",)),
    )(*args)
    return out[:E]


# ----------------------------------------------------------------------------
# Kernel 2: segment (scatter) sum of edge rows into atom rows via one-hot matmul,
#           E-tiled with a resident output accumulator (pl.when init / +=).
# ----------------------------------------------------------------------------
def _make_segsum_kernel(tile_a, tile_e):
    def kernel(ids_ref, val_ref, o_ref):
        @pl.when(pl.program_id(1) == 0)
        def _():
            o_ref[...] = jnp.zeros_like(o_ref)

        a0 = pl.program_id(0) * tile_a
        rows = lax.broadcasted_iota(jnp.int32, (tile_a, tile_e), 0) + a0
        onehot = (rows == ids_ref[...]).astype(jnp.float32)       # [tile_a, tile_e]
        o_ref[...] += jnp.dot(onehot, val_ref[...],
                              preferred_element_type=jnp.float32)  # [tile_a, C]
    return kernel


def segment_sum(values, segment_ids, num_segments, tile_a=128, tile_e=2048):
    """values: [E, C] f32, segment_ids: [E] int (>=0) -> [num_segments, C] sums."""
    E, C = values.shape
    tile_e = min(tile_e, _round_up(E, 128))
    E_pad = _round_up(E, tile_e)
    A_pad = _round_up(num_segments, tile_a)

    vals_p = jnp.zeros((E_pad, C), jnp.float32).at[:E].set(values.astype(jnp.float32))
    ids_p = jnp.full((1, E_pad), -1, jnp.int32).at[0, :E].set(
        segment_ids.astype(jnp.int32))

    out = pl.pallas_call(
        _make_segsum_kernel(tile_a, tile_e),
        out_shape=jax.ShapeDtypeStruct((A_pad, C), jnp.float32),
        grid=(A_pad // tile_a, E_pad // tile_e),
        in_specs=[pl.BlockSpec((1, tile_e), lambda i, k: (0, k)),
                  pl.BlockSpec((tile_e, C), lambda i, k: (k, 0))],
        out_specs=pl.BlockSpec((tile_a, C), lambda i, k: (i, 0)),
        compiler_params=pltpu.CompilerParams(
            dimension_semantics=("parallel", "arbitrary")),
    )(ids_p, vals_p)
    return out[:num_segments]


# ----------------------------------------------------------------------------
# Host precompute: ghost-edge mirroring + hash-sort reverse-edge pairing.
# Depends only on topology/geometry (inputs), NOT on the MLP output, so it is
# computed once up front and the device pipeline never syncs mid-flight.
# ----------------------------------------------------------------------------
# TODO(synk): the data-dependent concatenation / sort-based pairing has no clean
# static-shape Pallas form; it stays on host (mirrors the torch.no_grad block).
def _precompute_pairing(ec, en, el, uv):
    ec = ec.astype(np.int64)
    en = en.astype(np.int64)
    el = el.astype(np.float32)
    uv = uv.astype(np.float32)

    max_edge_center = ec[-1]
    ghost = en > max_edge_center
    ghost_idx = np.nonzero(ghost)[0].astype(np.int64)

    ec_aug = np.concatenate([ec, en[ghost]])
    en_aug = np.concatenate([en, ec[ghost]])
    el_aug = np.concatenate([el, el[ghost]])
    uv_aug = np.concatenate([uv, -1.0 * uv[ghost]], axis=0)

    h = (ec_aug + en_aug
         + (np.float32(1e10) * el_aug).astype(np.int64)
         + (np.float32(1e10) * np.abs(uv_aug).sum(axis=1)).astype(np.int64))

    if h.shape[0] % 2 != 0:
        index = np.argsort(h)
        uvs = uv_aug[index]
        tmp1 = np.concatenate([np.zeros((1, 3), np.float32), uvs[:-1]], axis=0)
        tmp2 = np.concatenate([uvs[1:], np.zeros((1, 3), np.float32)], axis=0)
        flag1 = np.any((uvs + tmp1) != 0, axis=1)
        flag2 = np.any((uvs + tmp2) != 0, axis=1)
        mask = (~flag1) | (~flag2)
        mask2 = (~flag1) & (~flag2)
        if np.count_nonzero(mask2) != 0:
            if index[mask].shape[0] % 2 != 0:
                mask[np.nonzero(mask2)[0]] = False
        edge_pairs = index[mask].reshape(-1, 2)
    else:
        edge_pairs = np.argsort(h).reshape(-1, 2)

    return {
        "ghost_idx": ghost_idx,
        "ec_aug": ec_aug,
        "p0": edge_pairs[:, 0],
        "p1": edge_pairs[:, 1],
        "num_atoms_real": int(ec.max()) + 1,
        "num_atoms_out": int(ec_aug.max()) + 1,
    }


# ----------------------------------------------------------------------------
# Single jitted device pipeline: MLP -> scatter-mean bias -> pair averaging ->
# edge forces -> scatter-sum of forces.  All shapes static (from host precompute).
# ----------------------------------------------------------------------------
@partial(jax.jit, static_argnames=("num_atoms_real", "num_atoms_out", "n_pos"))
def _device_forward(feats, edge_vectors, edge_lengths, edge_center,
                    ghost_idx, ec_aug, p0, p1, weights, biases,
                    *, num_atoms_real, num_atoms_out, n_pos):
    unit_vec = edge_vectors / edge_lengths[:, None]

    # (1) per-edge force magnitude = force_predictor(edge_emb)   [Pallas / MXU]
    em = mlp_forward(feats, weights, biases)                     # [E, 1]

    # (2) subtract per-center mean magnitude (scatter-mean)      [Pallas]
    ones = jnp.ones_like(em)
    sums = segment_sum(jnp.concatenate([em, ones], axis=1),
                       edge_center, num_atoms_real)              # [A_real, 2]
    atom_bias = sums[:, 0] / jnp.maximum(sums[:, 1], 1.0)
    em = em - atom_bias[edge_center][:, None]

    # (3) ghost-edge mirroring (static gather) + reverse-edge pair averaging
    em_aug = jnp.concatenate([em, em[ghost_idx]], axis=0)        # [E', 1]
    uv_aug = jnp.concatenate([unit_vec, -unit_vec[ghost_idx]], axis=0)
    avg = (em_aug[p0] + em_aug[p1]) * 0.5
    em_aug = em_aug.at[p0].set(avg)
    em_aug = em_aug.at[p1].set(avg)

    # (4) edge forces + per-atom force accumulation (scatter-sum)  [Pallas]
    edge_force = em_aug * uv_aug                                 # [E', 3]
    forces = segment_sum(edge_force, ec_aug, num_atoms_out)      # [A_out, 3]
    forces = jnp.concatenate(
        [forces, jnp.zeros((n_pos - num_atoms_out, 3), jnp.float32)], axis=0)
    return edge_force, forces


def direct_force_forward(data, weights, biases):
    # Host-side, input-only precompute (no sync on any kernel output).
    ec_np = np.asarray(data["edge_index"][0])
    en_np = np.asarray(data["edge_index"][1])
    el_np = np.asarray(data["edge_lengths"], np.float32)
    ev_np = np.asarray(data["edge_vectors"], np.float32)
    uv_np = ev_np / el_np[:, None]
    topo = _precompute_pairing(ec_np, en_np, el_np, uv_np)

    edge_force, forces = _device_forward(
        data["features_for_direct_force"], data["edge_vectors"], data["edge_lengths"],
        jnp.asarray(ec_np.astype(np.int32)),
        jnp.asarray(topo["ghost_idx"].astype(np.int32)),
        jnp.asarray(topo["ec_aug"].astype(np.int32)),
        jnp.asarray(topo["p0"].astype(np.int32)),
        jnp.asarray(topo["p1"].astype(np.int32)),
        tuple(weights), tuple(biases),
        num_atoms_real=topo["num_atoms_real"],
        num_atoms_out=topo["num_atoms_out"],
        n_pos=int(data["pos"].shape[0]))

    out = dict(data)
    out["edge_force"] = edge_force
    out["forces"] = forces
    out["_edge_center_aug"] = jnp.asarray(topo["ec_aug"].astype(np.int32))
    return out


# ----------------------------------------------------------------------------
# Deterministic parameter init (mimics torch.nn.Linear default init shapes)
# ----------------------------------------------------------------------------
def init_force_predictor(key, dimensions):
    sizes = [(dimensions[i], dimensions[i + 1]) for i in range(len(dimensions) - 1)]
    sizes.append((dimensions[-1], 1))
    weights, biases = [], []
    for (din, dout) in sizes:
        key, kw, kb = jax.random.split(key, 3)
        bound = 1.0 / math.sqrt(din)
        weights.append(jax.random.uniform(kw, (din, dout), jnp.float32, -bound, bound))
        biases.append(jax.random.uniform(kb, (dout,), jnp.float32, -bound, bound))
    return weights, biases


if __name__ == "__main__":
    key = jax.random.PRNGKey(0)
    kpos, kfeat, kparam = jax.random.split(key, 3)

    D0 = 32
    dimensions = [32, 32, 16]      # Linear(32,32)+SSP, Linear(32,16)+SSP, Linear(16,1)
    weights, biases = init_force_predictor(kparam, dimensions)

    # small graph: 4 real atoms (0..3), 2 ghost atoms (4,5), pos padded to 8 rows
    N_pos = 8
    pos = jax.random.normal(kpos, (N_pos, 3), jnp.float32) * 2.0
    edge_center = jnp.array([0, 0, 0, 1, 1, 1, 2, 2, 2, 3, 3, 3], jnp.int32)
    edge_neighbor = jnp.array([1, 2, 4, 0, 3, 5, 0, 3, 4, 1, 2, 5], jnp.int32)
    edge_index = jnp.stack([edge_center, edge_neighbor])
    edge_vectors = pos[edge_neighbor] - pos[edge_center]
    edge_lengths = jnp.sqrt(jnp.sum(edge_vectors * edge_vectors, axis=1))
    E = int(edge_center.shape[0])
    feats = jax.random.normal(kfeat, (E, D0), jnp.float32)

    data = {
        "features_for_direct_force": feats,
        "edge_vectors": edge_vectors,
        "edge_lengths": edge_lengths,
        "edge_index": edge_index,
        "pos": pos,
    }

    out = direct_force_forward(data, weights, biases)
    jax.block_until_ready(out["forces"])

    # --------------------- numpy reference for the full forward -----------------
    def _ssp_np(x):
        return np.maximum(x, 0.0) + np.log(1.0 + np.exp(-np.abs(x))) - LOG2

    h_ref = np.asarray(feats, np.float32)
    for i, (w, b) in enumerate(zip(weights, biases)):
        h_ref = h_ref @ np.asarray(w, np.float32) + np.asarray(b, np.float32)
        if i < len(weights) - 1:
            h_ref = _ssp_np(h_ref)

    # Pallas MLP check
    em_pallas = np.asarray(mlp_forward(feats, weights, biases))
    np.testing.assert_allclose(em_pallas, h_ref, rtol=2e-2, atol=2e-2)

    ec_np = np.asarray(edge_center)
    el_np = np.asarray(edge_lengths, np.float32)
    uv_np = np.asarray(edge_vectors, np.float32) / el_np[:, None]

    nA = int(ec_np.max()) + 1
    s = np.zeros((nA,), np.float32)
    c = np.zeros((nA,), np.float32)
    np.add.at(s, ec_np, h_ref[:, 0])
    np.add.at(c, ec_np, 1.0)
    bias_np = s / np.maximum(c, 1.0)
    em_np = h_ref - bias_np[ec_np][:, None]

    topo = _precompute_pairing(ec_np, np.asarray(edge_neighbor), el_np, uv_np)
    gi = topo["ghost_idx"]
    em_aug_np = np.concatenate([em_np, em_np[gi]], axis=0)
    uv_aug_np = np.concatenate([uv_np, -uv_np[gi]], axis=0)
    p0, p1 = topo["p0"], topo["p1"]
    avg = (em_aug_np[p0] + em_aug_np[p1]) / 2.0
    em_aug_np[p0] = avg
    em_aug_np[p1] = avg
    ef_ref = em_aug_np * uv_aug_np
    f_ref = np.zeros((topo["num_atoms_out"], 3), np.float32)
    np.add.at(f_ref, topo["ec_aug"], ef_ref)
    f_ref = np.concatenate(
        [f_ref, np.zeros((N_pos - topo["num_atoms_out"], 3), np.float32)], axis=0)

    np.testing.assert_allclose(np.asarray(out["edge_force"]), ef_ref,
                               rtol=2e-2, atol=2e-2)
    np.testing.assert_allclose(np.asarray(out["forces"]), f_ref,
                               rtol=2e-2, atol=2e-2)

    print("KERNEL_OK")
</pallas_src>

<mosaic_0001>
module attributes {stable_mosaic.version = 11 : i64} {
  func.func @kernel(%arg0: i32, %arg1: memref<16x32xf32, #tpu.memory_space<vmem>>, %arg2: memref<32x32xf32, #tpu.memory_space<vmem>>, %arg3: memref<1x32xf32, #tpu.memory_space<vmem>>, %arg4: memref<32x16xf32, #tpu.memory_space<vmem>>, %arg5: memref<1x16xf32, #tpu.memory_space<vmem>>, %arg6: memref<1x16xf32, #tpu.memory_space<vmem>>, %arg7: memref<1x1xf32, #tpu.memory_space<vmem>>, %arg8: memref<16x1xf32, #tpu.memory_space<vmem>>) attributes {dimension_semantics = [#tpu.dimension_semantics<parallel>], iteration_bounds = array<i64: 1>, scalar_prefetch = 0 : i64, scratch_operands = 0 : i64, tpu.core_type = #tpu.core_type<tc>, window_params = [{transform_indices = @transform_0, window_bounds = array<i64: 16, 32>}, {pipeline_mode = #tpu.pipeline_mode<synchronous>, transform_indices = @transform_1, window_bounds = array<i64: 32, 32>}, {pipeline_mode = #tpu.pipeline_mode<synchronous>, transform_indices = @transform_2, window_bounds = array<i64: 1, 32>}, {pipeline_mode = #tpu.pipeline_mode<synchronous>, transform_indices = @transform_3, window_bounds = array<i64: 32, 16>}, {pipeline_mode = #tpu.pipeline_mode<synchronous>, transform_indices = @transform_4, window_bounds = array<i64: 1, 16>}, {pipeline_mode = #tpu.pipeline_mode<synchronous>, transform_indices = @transform_5, window_bounds = array<i64: 1, 16>}, {pipeline_mode = #tpu.pipeline_mode<synchronous>, transform_indices = @transform_6, window_bounds = array<i64: 1, 1>}, {transform_indices = @transform_7, window_bounds = array<i64: 16, 1>}]} {
    %c0 = arith.constant 0 : index
    %c0_0 = arith.constant 0 : index
    %0 = vector.load %arg1[%c0, %c0_0] : memref<16x32xf32, #tpu.memory_space<vmem>>, vector<16x32xf32>
    %c0_1 = arith.constant 0 : index
    %c0_2 = arith.constant 0 : index
    %1 = vector.load %arg2[%c0_1, %c0_2] : memref<32x32xf32, #tpu.memory_space<vmem>>, vector<32x32xf32>
    %c0_3 = arith.constant 0 : index
    %c0_4 = arith.constant 0 : index
    %2 = vector.load %arg3[%c0_3, %c0_4] : memref<1x32xf32, #tpu.memory_space<vmem>>, vector<1x32xf32>
    %cst = arith.constant dense<0.000000e+00> : vector<16x32xf32>
    %3 = tpu.matmul %0, %1, %cst {dimension_numbers = #tpu.dot_dimension_numbers<[1], [0], [0], [1], [0, 0, 1, 1], [], []>} : vector<16x32xf32>, vector<32x32xf32>, vector<16x32xf32> -> vector<16x32xf32>
    %4 = vector.broadcast %2 : vector<1x32xf32> to vector<16x32xf32>
    %5 = arith.addf %3, %4 : vector<16x32xf32>
    %cst_5 = arith.constant 0.000000e+00 : f32
    %6 = vector.broadcast %cst_5 : f32 to vector<16x32xf32>
    %7 = arith.maximumf %5, %6 : vector<16x32xf32>
    %8 = math.absf %5 : vector<16x32xf32>
    %cst_6 = arith.constant 0.000000e+00 : f32
    %9 = vector.broadcast %cst_6 : f32 to vector<16x32xf32>
    %10 = arith.subf %9, %8 : vector<16x32xf32>
    %11 = math.exp %10 : vector<16x32xf32>
    %cst_7 = arith.constant 1.000000e+00 : f32
    %12 = vector.broadcast %cst_7 : f32 to vector<16x32xf32>
    %13 = arith.addf %12, %11 : vector<16x32xf32>
    %14 = math.log %13 : vector<16x32xf32>
    %15 = arith.addf %7, %14 : vector<16x32xf32>
    %cst_8 = arith.constant 0.693147182 : f32
    %16 = vector.broadcast %cst_8 : f32 to vector<16x32xf32>
    %17 = arith.subf %15, %16 : vector<16x32xf32>
    %c0_9 = arith.constant 0 : index
    %c0_10 = arith.constant 0 : index
    %18 = vector.load %arg4[%c0_9, %c0_10] : memref<32x16xf32, #tpu.memory_space<vmem>>, vector<32x16xf32>
    %c0_11 = arith.constant 0 : index
    %c0_12 = arith.constant 0 : index
    %19 = vector.load %arg5[%c0_11, %c0_12] : memref<1x16xf32, #tpu.memory_space<vmem>>, vector<1x16xf32>
    %cst_13 = arith.constant dense<0.000000e+00> : vector<16x16xf32>
    %20 = tpu.matmul %17, %18, %cst_13 {dimension_numbers = #tpu.dot_dimension_numbers<[1], [0], [0], [1], [0, 0, 1, 1], [], []>} : vector<16x32xf32>, vector<32x16xf32>, vector<16x16xf32> -> vector<16x16xf32>
    %21 = vector.broadcast %19 : vector<1x16xf32> to vector<16x16xf32>
    %22 = arith.addf %20, %21 : vector<16x16xf32>
    %cst_14 = arith.constant 0.000000e+00 : f32
    %23 = vector.broadcast %cst_14 : f32 to vector<16x16xf32>
    %24 = arith.maximumf %22, %23 : vector<16x16xf32>
    %25 = math.absf %22 : vector<16x16xf32>
    %cst_15 = arith.constant 0.000000e+00 : f32
    %26 = vector.broadcast %cst_15 : f32 to vector<16x16xf32>
    %27 = arith.subf %26, %25 : vector<16x16xf32>
    %28 = math.exp %27 : vector<16x16xf32>
    %cst_16 = arith.constant 1.000000e+00 : f32
    %29 = vector.broadcast %cst_16 : f32 to vector<16x16xf32>
    %30 = arith.addf %29, %28 : vector<16x16xf32>
    %31 = math.log %30 : vector<16x16xf32>
    %32 = arith.addf %24, %31 : vector<16x16xf32>
    %cst_17 = arith.constant 0.693147182 : f32
    %33 = vector.broadcast %cst_17 : f32 to vector<16x16xf32>
    %34 = arith.subf %32, %33 : vector<16x16xf32>
    %c0_18 = arith.constant 0 : index
    %c0_19 = arith.constant 0 : index
    %35 = vector.load %arg6[%c0_18, %c0_19] : memref<1x16xf32, #tpu.memory_space<vmem>>, vector<1x16xf32>
    %c0_20 = arith.constant 0 : index
    %c0_21 = arith.constant 0 : index
    %36 = vector.load %arg7[%c0_20, %c0_21] : memref<1x1xf32, #tpu.memory_space<vmem>>, vector<1x1xf32>
    %37 = vector.broadcast %35 : vector<1x16xf32> to vector<16x16xf32>
    %38 = arith.mulf %34, %37 : vector<16x16xf32>
    %cst_22 = arith.constant dense<0.000000e+00> : vector<16xf32>
    %39 = vector.multi_reduction <add>, %38, %cst_22 [1] : vector<16x16xf32> to vector<16xf32>
    %40 = vector.shape_cast %39 : vector<16xf32> to vector<16x1xf32>
    %41 = vector.broadcast %36 : vector<1x1xf32> to vector<16x1xf32>
    %42 = arith.addf %40, %41 : vector<16x1xf32>
    %c0_23 = arith.constant 0 : index
    %c0_24 = arith.constant 0 : index
    %43 = vector.load %arg8[%c0_23, %c0_24] : memref<16x1xf32, #tpu.memory_space<vmem>>, vector<16x1xf32>
    tpu.vector_store %arg8[%c0_23, %c0_24], %42 {strides = array<i32>} : memref<16x1xf32, #tpu.memory_space<vmem>>, vector<16x1xf32>,
    return
  }
  func.func @transform_0(%arg0: i32) -> (i32, i32) {
    %c0_i32 = arith.constant 0 : i32
    %c0_i32_0 = arith.constant 0 : i32
    return %arg0, %c0_i32 : i32, i32
  }
  func.func @transform_1(%arg0: i32) -> (i32, i32) {
    %c0_i32 = arith.constant 0 : i32
    %c0_i32_0 = arith.constant 0 : i32
    %c0_i32_1 = arith.constant 0 : i32
    return %c0_i32, %c0_i32_0 : i32, i32
  }
  func.func @transform_2(%arg0: i32) -> (i32, i32) {
    %c0_i32 = arith.constant 0 : i32
    %c0_i32_0 = arith.constant 0 : i32
    %c0_i32_1 = arith.constant 0 : i32
    return %c0_i32, %c0_i32_0 : i32, i32
  }
  func.func @transform_3(%arg0: i32) -> (i32, i32) {
    %c0_i32 = arith.constant 0 : i32
    %c0_i32_0 = arith.constant 0 : i32
    %c0_i32_1 = arith.constant 0 : i32
    return %c0_i32, %c0_i32_0 : i32, i32
  }
  func.func @transform_4(%arg0: i32) -> (i32, i32) {
    %c0_i32 = arith.constant 0 : i32
    %c0_i32_0 = arith.constant 0 : i32
    %c0_i32_1 = arith.constant 0 : i32
    return %c0_i32, %c0_i32_0 : i32, i32
  }
  func.func @transform_5(%arg0: i32) -> (i32, i32) {
    %c0_i32 = arith.constant 0 : i32
    %c0_i32_0 = arith.constant 0 : i32
    %c0_i32_1 = arith.constant 0 : i32
    return %c0_i32, %c0_i32_0 : i32, i32
  }
  func.func @transform_6(%arg0: i32) -> (i32, i32) {
    %c0_i32 = arith.constant 0 : i32
    %c0_i32_0 = arith.constant 0 : i32
    %c0_i32_1 = arith.constant 0 : i32
    return %c0_i32, %c0_i32_0 : i32, i32
  }
  func.func @transform_7(%arg0: i32) -> (i32, i32) {
    %c0_i32 = arith.constant 0 : i32
    %c0_i32_0 = arith.constant 0 : i32
    return %arg0, %c0_i32 : i32, i32
  }
}

module attributes {stable_mosaic.version = 11 : i64} {
  func.func @kernel(%arg0: i32, %arg1: i32, %arg2: memref<1x128xi32, #tpu.memory_space<vmem>>, %arg3: memref<128x2xf32, #tpu.memory_space<vmem>>, %arg4: memref<128x2xf32, #tpu.memory_space<vmem>>) attributes {dimension_semantics = [#tpu.dimension_semantics<parallel>, #tpu.dimension_semantics<arbitrary>], iteration_bounds = array<i64: 1, 1>, scalar_prefetch = 0 : i64, scratch_operands = 0 : i64, tpu.core_type = #tpu.core_type<tc>, window_params = [{transform_indices = @transform_0, window_bounds = array<i64: 1, 128>}, {transform_indices = @transform_1, window_bounds = array<i64: 128, 2>}, {transform_indices = @transform_2, window_bounds = array<i64: 128, 2>}]} {
    %c0_i32 = arith.constant 0 : i32
    %0 = arith.cmpi eq, %arg1, %c0_i32 : i32
    %1 = arith.extui %0 : i1 to i32
    %c0_i32_0 = arith.constant 0 : i32
    %2 = arith.cmpi ne, %1, %c0_i32_0 : i32
    scf.if %2 {
      %cst_8 = arith.constant 0.000000e+00 : f32
      %17 = vector.broadcast %cst_8 : f32 to vector<128x2xf32>
      %c0_9 = arith.constant 0 : index
      %c0_10 = arith.constant 0 : index
      %18 = vector.load %arg4[%c0_9, %c0_10] : memref<128x2xf32, #tpu.memory_space<vmem>>, vector<128x2xf32>
      tpu.vector_store %arg4[%c0_9, %c0_10], %17 {strides = array<i32>} : memref<128x2xf32, #tpu.memory_space<vmem>>, vector<128x2xf32>,
    } else {
    }
    %c128_i32 = arith.constant 128 : i32
    %3 = arith.muli %arg0, %c128_i32 : i32
    %4 = tpu.iota {dimensions = array<i32: 0>} : vector<128x128xi32>
    %5 = vector.broadcast %3 : i32 to vector<128x128xi32>
    %6 = arith.addi %4, %5 : vector<128x128xi32>
    %c0 = arith.constant 0 : index
    %c0_1 = arith.constant 0 : index
    %7 = vector.load %arg2[%c0, %c0_1] : memref<1x128xi32, #tpu.memory_space<vmem>>, vector<1x128xi32>
    %8 = vector.broadcast %7 : vector<1x128xi32> to vector<128x128xi32>
    %9 = arith.cmpi eq, %6, %8 : vector<128x128xi32>
    %10 = arith.extui %9 : vector<128x128xi1> to vector<128x128xi32>
    %11 = arith.sitofp %10 : vector<128x128xi32> to vector<128x128xf32>
    %c0_2 = arith.constant 0 : index
    %c0_3 = arith.constant 0 : index
    %12 = vector.load %arg4[%c0_2, %c0_3] : memref<128x2xf32, #tpu.memory_space<vmem>>, vector<128x2xf32>
    %c0_4 = arith.constant 0 : index
    %c0_5 = arith.constant 0 : index
    %13 = vector.load %arg3[%c0_4, %c0_5] : memref<128x2xf32, #tpu.memory_space<vmem>>, vector<128x2xf32>
    %cst = arith.constant dense<0.000000e+00> : vector<128x2xf32>
    %14 = tpu.matmul %11, %13, %cst {dimension_numbers = #tpu.dot_dimension_numbers<[1], [0], [0], [1], [0, 0, 1, 1], [], []>} : vector<128x128xf32>, vector<128x2xf32>, vector<128x2xf32> -> vector<128x2xf32>
    %15 = arith.addf %12, %14 : vector<128x2xf32>
    %c0_6 = arith.constant 0 : index
    %c0_7 = arith.constant 0 : index
    %16 = vector.load %arg4[%c0_6, %c0_7] : memref<128x2xf32, #tpu.memory_space<vmem>>, vector<128x2xf32>
    tpu.vector_store %arg4[%c0_6, %c0_7], %15 {strides = array<i32>} : memref<128x2xf32, #tpu.memory_space<vmem>>, vector<128x2xf32>,
    return
  }
  func.func @transform_0(%arg0: i32, %arg1: i32) -> (i32, i32) {
    %c0_i32 = arith.constant 0 : i32
    %c0_i32_0 = arith.constant 0 : i32
    return %c0_i32, %arg1 : i32, i32
  }
  func.func @transform_1(%arg0: i32, %arg1: i32) -> (i32, i32) {
    %c0_i32 = arith.constant 0 : i32
    %c0_i32_0 = arith.constant 0 : i32
    return %arg1, %c0_i32 : i32, i32
  }
  func.func @transform_2(%arg0: i32, %arg1: i32) -> (i32, i32) {
    %c0_i32 = arith.constant 0 : i32
    %c0_i32_0 = arith.constant 0 : i32
    return %arg0, %c0_i32 : i32, i32
  }
}

module attributes {stable_mosaic.version = 11 : i64} {
  func.func @kernel(%arg0: i32, %arg1: i32, %arg2: memref<1x128xi32, #tpu.memory_space<vmem>>, %arg3: memref<128x3xf32, #tpu.memory_space<vmem>>, %arg4: memref<128x3xf32, #tpu.memory_space<vmem>>) attributes {dimension_semantics = [#tpu.dimension_semantics<parallel>, #tpu.dimension_semantics<arbitrary>], iteration_bounds = array<i64: 1, 1>, scalar_prefetch = 0 : i64, scratch_operands = 0 : i64, tpu.core_type = #tpu.core_type<tc>, window_params = [{transform_indices = @transform_0, window_bounds = array<i64: 1, 128>}, {transform_indices = @transform_1, window_bounds = array<i64: 128, 3>}, {transform_indices = @transform_2, window_bounds = array<i64: 128, 3>}]} {
    %c0_i32 = arith.constant 0 : i32
    %0 = arith.cmpi eq, %arg1, %c0_i32 : i32
    %1 = arith.extui %0 : i1 to i32
    %c0_i32_0 = arith.constant 0 : i32
    %2 = arith.cmpi ne, %1, %c0_i32_0 : i32
    scf.if %2 {
      %cst_8 = arith.constant 0.000000e+00 : f32
      %17 = vector.broadcast %cst_8 : f32 to vector<128x3xf32>
      %c0_9 = arith.constant 0 : index
      %c0_10 = arith.constant 0 : index
      %18 = vector.load %arg4[%c0_9, %c0_10] : memref<128x3xf32, #tpu.memory_space<vmem>>, vector<128x3xf32>
      tpu.vector_store %arg4[%c0_9, %c0_10], %17 {strides = array<i32>} : memref<128x3xf32, #tpu.memory_space<vmem>>, vector<128x3xf32>,
    } else {
    }
    %c128_i32 = arith.constant 128 : i32
    %3 = arith.muli %arg0, %c128_i32 : i32
    %4 = tpu.iota {dimensions = array<i32: 0>} : vector<128x128xi32>
    %5 = vector.broadcast %3 : i32 to vector<128x128xi32>
    %6 = arith.addi %4, %5 : vector<128x128xi32>
    %c0 = arith.constant 0 : index
    %c0_1 = arith.constant 0 : index
    %7 = vector.load %arg2[%c0, %c0_1] : memref<1x128xi32, #tpu.memory_space<vmem>>, vector<1x128xi32>
    %8 = vector.broadcast %7 : vector<1x128xi32> to vector<128x128xi32>
    %9 = arith.cmpi eq, %6, %8 : vector<128x128xi32>
    %10 = arith.extui %9 : vector<128x128xi1> to vector<128x128xi32>
    %11 = arith.sitofp %10 : vector<128x128xi32> to vector<128x128xf32>
    %c0_2 = arith.constant 0 : index
    %c0_3 = arith.constant 0 : index
    %12 = vector.load %arg4[%c0_2, %c0_3] : memref<128x3xf32, #tpu.memory_space<vmem>>, vector<128x3xf32>
    %c0_4 = arith.constant 0 : index
    %c0_5 = arith.constant 0 : index
    %13 = vector.load %arg3[%c0_4, %c0_5] : memref<128x3xf32, #tpu.memory_space<vmem>>, vector<128x3xf32>
    %cst = arith.constant dense<0.000000e+00> : vector<128x3xf32>
    %14 = tpu.matmul %11, %13, %cst {dimension_numbers = #tpu.dot_dimension_numbers<[1], [0], [0], [1], [0, 0, 1, 1], [], []>} : vector<128x128xf32>, vector<128x3xf32>, vector<128x3xf32> -> vector<128x3xf32>
    %15 = arith.addf %12, %14 : vector<128x3xf32>
    %c0_6 = arith.constant 0 : index
    %c0_7 = arith.constant 0 : index
    %16 = vector.load %arg4[%c0_6, %c0_7] : memref<128x3xf32, #tpu.memory_space<vmem>>, vector<128x3xf32>
    tpu.vector_store %arg4[%c0_6, %c0_7], %15 {strides = array<i32>} : memref<128x3xf32, #tpu.memory_space<vmem>>, vector<128x3xf32>,
    return
  }
  func.func @transform_0(%arg0: i32, %arg1: i32) -> (i32, i32) {
    %c0_i32 = arith.constant 0 : i32
    %c0_i32_0 = arith.constant 0 : i32
    return %c0_i32, %arg1 : i32, i32
  }
  func.func @transform_1(%arg0: i32, %arg1: i32) -> (i32, i32) {
    %c0_i32 = arith.constant 0 : i32
    %c0_i32_0 = arith.constant 0 : i32
    return %arg1, %c0_i32 : i32, i32
  }
  func.func @transform_2(%arg0: i32, %arg1: i32) -> (i32, i32) {
    %c0_i32 = arith.constant 0 : i32
    %c0_i32_0 = arith.constant 0 : i32
    return %arg0, %c0_i32 : i32, i32
  }
}

</mosaic_0001>

<llo_original>
// kernel: _device_forward.3
$region0: #{_device_forward.3}
  #allocation0 [shape = 'u32[]', space=smem, size = 0x4, offset = 0x4, fixed_abs, tag = 'smem constant byte address 0x4 - core index']
  #allocation1 [shape = 'u32[144,128]{1,0:T(1,128)}', space=vmem, size = 0x12000, scoped, tag = 'internal scratch']
  #allocation2 [shape = 'f32[1,1]{1,0:T(1,128)S(1)}', space=vmem, size = 0x200, scoped, tag = 'scoped memory for _device_forward.3']
  %s0 = inlined_call_operand.vmem [shape: f32[16,32], index: 0, kind: input, shape index: {}]
  %s1 = inlined_call_operand.vmem [shape: f32[32,32], index: 1, kind: input, shape index: {}]
  %s2 = inlined_call_operand.vmem [shape: f32[1,32], index: 2, kind: input, shape index: {}]
  %s3 = inlined_call_operand.vmem [shape: f32[32,16], index: 3, kind: input, shape index: {}]
  %s4 = inlined_call_operand.vmem [shape: f32[1,16], index: 4, kind: input, shape index: {}]
  %s5 = inlined_call_operand.vmem [shape: f32[1,16], index: 5, kind: input, shape index: {}]
  %s6 = inlined_call_operand.<no memory space> [shape: f32[1,1], index: 6, kind: input, shape index: {}]
  %s7 = inlined_call_operand.vmem [shape: f32[16,1], index: 7, kind: output, shape index: {}]
  %s8 = sld [smem:[#allocation0]]
  $region38: #{_device_forward.3} parent=0
    _
  %s10 = ssub.s32 1, %s8
  %s11 = scalar_select 0, %s10, %s8
  %v12 = vstv %s6
  %13 = vst [vmem:[#allocation2] sm:$0x1] %v12
  // Predicated region
  $region2: #{_device_forward.3} parent=0 // pred_check
    _
  $region3: #{_device_forward.3} parent=0 // pred_check_branch
    %15 = sbr.rel (0) target = $region5
  $region4: #{_device_forward.3} parent=0 // pred_region
    _
  $region5: #{_device_forward.3} parent=0 // pred_fallthru
    _
  // Predicated region
  $region6: #{_device_forward.3} parent=0 // pred_check
    _
  $region7: #{_device_forward.3} parent=0 // pred_check_branch
    %17 = sbr.rel (0) target = $region9
  $region8: #{_device_forward.3} parent=0 // pred_region
    _
  $region9: #{_device_forward.3} parent=0 // pred_fallthru
    _
  // Predicated region
  $region10: #{_device_forward.3} parent=0 // pred_check
    _
  $region11: #{_device_forward.3} parent=0 // pred_check_branch
    %19 = sbr.rel (0) target = $region13
  $region12: #{_device_forward.3} parent=0 // pred_region
    _
  $region13: #{_device_forward.3} parent=0 // pred_fallthru
    _
  // Predicated region
  $region14: #{_device_forward.3} parent=0 // pred_check
    _
  $region15: #{_device_forward.3} parent=0 // pred_check_branch
    %21 = sbr.rel (0) target = $region17
  $region16: #{_device_forward.3} parent=0 // pred_region
    _
  $region17: #{_device_forward.3} parent=0 // pred_fallthru
    _
  // Predicated region
  $region18: #{_device_forward.3} parent=0 // pred_check
    _
  $region19: #{_device_forward.3} parent=0 // pred_check_branch
    %23 = sbr.rel (0) target = $region21
  $region20: #{_device_forward.3} parent=0 // pred_region
    _
  $region21: #{_device_forward.3} parent=0 // pred_fallthru
    _
  // Predicated region
  $region22: #{_device_forward.3} parent=0 // pred_check
    _
  $region23: #{_device_forward.3} parent=0 // pred_check_branch
    %25 = sbr.rel (0) target = $region25
  $region24: #{_device_forward.3} parent=0 // pred_region
    _
  $region25: #{_device_forward.3} parent=0 // pred_fallthru
    _
  // Predicated region
  $region26: #{_device_forward.3} parent=0 // pred_check
    _
  $region27: #{_device_forward.3} parent=0 // pred_check_branch
    %27 = sbr.rel (0) target = $region29
  $region28: #{_device_forward.3} parent=0 // pred_region
    _
  $region29: #{_device_forward.3} parent=0 // pred_fallthru
    _
  %v28 = vld [vmem:[%s0] sm:$0xff]
  %v29 = vld [vmem:[%s0 + $0x8] sm:$0xff]
  %v30 = vld [vmem:[%s1] sm:$0xff]
  %v31 = vld [vmem:[%s1 + $0x8] sm:$0xff]
  %v32 = vld [vmem:[%s1 + $0x10] sm:$0xff]
  %v33 = vld [vmem:[%s1 + $0x18] sm:$0xff]
  %v34 = vld [vmem:[%s2] sm:$0x1]
  %v36 = vlaneseq
  %v37 = vshrl.u32 %v36, 7
  %v38 = vsub.s32 0, %v37
  %v39 = vrot.slane %v34, %v38
  %vm41 = vcmask 261120
  %v43 = vsel %vm41, %v28, 0
  %v46 = vsel %vm41, %v29, 0
  %48 = vmatprep.subr.mxu0 0.0
  %49 = vmatpush1.msra.mxu0 %v30
  %50 = vmatprep.subr.mxu0 0.0
  %51 = vmatpush1.msra.mxu0 %v31
  %52 = vmatprep.subr.mxu0 0.0
  %53 = vmatpush1.msra.mxu0 %v32
  %54 = vmatprep.subr.mxu0 0.0
  %55 = vmatpush1.msra.mxu0 %v33
  %56 = vmatprep.subr.mxu0 0.0
  %57 = vmatpush1.msra.mxu0 0.0
  %58 = vmatprep.subr.mxu0 0.0
  %59 = vmatpush1.msra.mxu0 0.0
  %60 = vmatprep.subr.mxu0 0.0
  %61 = vmatpush1.msra.mxu0 0.0
  %62 = vmatprep.subr.mxu0 0.0
  %63 = vmatpush1.msra.mxu0 0.0
  %64 = vmatprep.subr.mxu0 0.0
  %65 = vmatpush1.msra.mxu0 0.0
  %66 = vmatprep.subr.mxu0 0.0
  %67 = vmatpush1.msra.mxu0 0.0
  %68 = vmatprep.subr.mxu0 0.0
  %69 = vmatpush1.msra.mxu0 0.0
  %70 = vmatprep.subr.mxu0 0.0
  %71 = vmatpush1.msra.mxu0 0.0
  %72 = vmatprep.subr.mxu0 0.0
  %73 = vmatpush1.msra.mxu0 0.0
  %74 = vmatprep.subr.mxu0 0.0
  %75 = vmatpush1.msra.mxu0 0.0
  %76 = vmatprep.subr.mxu0 0.0
  %77 = vmatpush1.msra.mxu0 0.0
  %78 = vmatprep.subr.mxu0 0.0
  %79 = vmatpush1.msra.mxu0 0.0
  %80 = vmatprep.subr.mxu0 0.0
  %81 = vmatpush1.msra.mxu0 0.0
  %82 = vmatprep.subr.mxu0 0.0
  %83 = vmatpush1.msra.mxu0 0.0
  %84 = vmatprep.subr.mxu0 0.0
  %85 = vmatpush1.msra.mxu0 0.0
  %86 = vmatprep.subr.mxu0 0.0
  %87 = vmatpush1.msra.mxu0 0.0
  %88 = vmatprep.subr.mxu0 0.0
  %89 = vmatpush1.msra.mxu0 0.0
  %90 = vmatprep.subr.mxu0 0.0
  %91 = vmatpush1.msra.mxu0 0.0
  %92 = vmatprep.subr.mxu0 0.0
  %93 = vmatpush1.msra.mxu0 0.0
  %94 = vmatprep.subr.mxu0 0.0
  %95 = vmatpush1.msra.mxu0 0.0
  %96 = vmatprep.subr.mxu0 0.0
  %97 = vmatpush1.msra.mxu0 0.0
  %98 = vmatprep.subr.mxu0 0.0
  %99 = vmatpush1.msra.mxu0 0.0
  %100 = vmatprep.subr.mxu0 0.0
  %101 = vmatpush1.msra.mxu0 0.0
  %102 = vmatprep.subr.mxu0 0.0
  %103 = vmatpush1.msra.mxu0 0.0
  %104 = vmatprep.subr.mxu0 0.0
  %105 = vmatpush1.msra.mxu0 0.0
  %106 = vmatprep.subr.mxu0 0.0
  %107 = vmatpush1.msra.mxu0 0.0
  %108 = vmatprep.subr.mxu0 0.0
  %109 = vmatpush1.msra.mxu0 0.0
  %110 = vmatprep.subr.mxu0 0.0
  %111 = vmatpush1.msra.mxu0 0.0
  %112 = vmatprep.mubr.f32.mxu0 0.0
  %113 = vmatmul.mubr.f32.gmra.mrb[0].mxu0 %v43
  %v114 = vpop.f32.mrb[0].mxu0
  %v115 = vadd.f32 %v39, %v114
  %v116 = vpop.f32.mrb[0].mxu0
  %117 = vmatprep.mubr.f32.mxu0 0.0
  %118 = vmatmul.mubr.f32.gmra.mrb[0].mxu0 %v46
  %v119 = vpop.f32.mrb[0].mxu0
  %v120 = vadd.f32 %v39, %v119
  %v121 = vpop.f32.mrb[0].mxu0
  %122 = vdwg.mxu0
  %v123 = vmax.f32 %v115, 0.0
  %v124 = vmax.f32 %v120, 0.0
  %v125 = vand.u32 2147483647, %v115
  %v126 = vand.u32 2147483647, %v120
  %v127 = vsub.f32 0.0, %v125
  %v128 = vsub.f32 0.0, %v126
  %v129 = vmul.f32 %v127, 1.442695
  %v130 = vpow.pop %v129
  %v131 = vmul.f32 %v128, 1.442695
  %v132 = vpow.pop %v131
  %v133 = vadd.f32 %v130, 1.0
  %v134 = vadd.f32 %v132, 1.0
  %v135 = vlog2.pop %v133
  %v136 = vmul.f32 %v135, 0.6931472
  %v137 = vlog2.pop %v134
  %v138 = vmul.f32 %v137, 0.6931472
  %v139 = vadd.f32 %v123, %v136
  %v140 = vadd.f32 %v124, %v138
  %v141 = vsub.f32 %v139, 0.6931472
  %v142 = vsub.f32 %v140, 0.6931472
  %v143 = vld [vmem:[%s3] sm:$0xff]
  %v144 = vld [vmem:[%s3 + $0x8] sm:$0xff]
  %v145 = vld [vmem:[%s3 + $0x10] sm:$0xff]
  %v146 = vld [vmem:[%s3 + $0x18] sm:$0xff]
  %v147 = vld [vmem:[%s4] sm:$0x1]
  %v149 = vlaneseq
  %v150 = vshrl.u32 %v149, 7
  %v151 = vsub.s32 0, %v150
  %v152 = vrot.slane %v147, %v151
  %v155 = vsel %vm41, %v141, 0
  %v158 = vsel %vm41, %v142, 0
  %160 = vmatprep.subr.mxu0 0.0
  %161 = vmatpush1.msra.mxu0 %v143
  %162 = vmatprep.subr.mxu0 0.0
  %163 = vmatpush1.msra.mxu0 %v144
  %164 = vmatprep.subr.mxu0 0.0
  %165 = vmatpush1.msra.mxu0 %v145
  %166 = vmatprep.subr.mxu0 0.0
  %167 = vmatpush1.msra.mxu0 %v146
  %168 = vmatprep.subr.mxu0 0.0
  %169 = vmatpush1.msra.mxu0 0.0
  %170 = vmatprep.subr.mxu0 0.0
  %171 = vmatpush1.msra.mxu0 0.0
  %172 = vmatprep.subr.mxu0 0.0
  %173 = vmatpush1.msra.mxu0 0.0
  %174 = vmatprep.subr.mxu0 0.0
  %175 = vmatpush1.msra.mxu0 0.0
  %176 = vmatprep.subr.mxu0 0.0
  %177 = vmatpush1.msra.mxu0 0.0
  %178 = vmatprep.subr.mxu0 0.0
  %179 = vmatpush1.msra.mxu0 0.0
  %180 = vmatprep.subr.mxu0 0.0
  %181 = vmatpush1.msra.mxu0 0.0
  %182 = vmatprep.subr.mxu0 0.0
  %183 = vmatpush1.msra.mxu0 0.0
  %184 = vmatprep.subr.mxu0 0.0
  %185 = vmatpush1.msra.mxu0 0.0
  %186 = vmatprep.subr.mxu0 0.0
  %187 = vmatpush1.msra.mxu0 0.0
  %188 = vmatprep.subr.mxu0 0.0
  %189 = vmatpush1.msra.mxu0 0.0
  %190 = vmatprep.subr.mxu0 0.0
  %191 = vmatpush1.msra.mxu0 0.0
  %192 = vmatprep.subr.mxu0 0.0
  %193 = vmatpush1.msra.mxu0 0.0
  %194 = vmatprep.subr.mxu0 0.0
  %195 = vmatpush1.msra.mxu0 0.0
  %196 = vmatprep.subr.mxu0 0.0
  %197 = vmatpush1.msra.mxu0 0.0
  %198 = vmatprep.subr.mxu0 0.0
  %199 = vmatpush1.msra.mxu0 0.0
  %200 = vmatprep.subr.mxu0 0.0
  %201 = vmatpush1.msra.mxu0 0.0
  %202 = vmatprep.subr.mxu0 0.0
  %203 = vmatpush1.msra.mxu0 0.0
  %204 = vmatprep.subr.mxu0 0.0
  %205 = vmatpush1.msra.mxu0 0.0
  %206 = vmatprep.subr.mxu0 0.0
  %207 = vmatpush1.msra.mxu0 0.0
  %208 = vmatprep.subr.mxu0 0.0
  %209 = vmatpush1.msra.mxu0 0.0
  %210 = vmatprep.subr.mxu0 0.0
  %211 = vmatpush1.msra.mxu0 0.0
  %212 = vmatprep.subr.mxu0 0.0
  %213 = vmatpush1.msra.mxu0 0.0
  %214 = vmatprep.subr.mxu0 0.0
  %215 = vmatpush1.msra.mxu0 0.0
  %216 = vmatprep.subr.mxu0 0.0
  %217 = vmatpush1.msra.mxu0 0.0
  %218 = vmatprep.subr.mxu0 0.0
  %219 = vmatpush1.msra.mxu0 0.0
  %220 = vmatprep.subr.mxu0 0.0
  %221 = vmatpush1.msra.mxu0 0.0
  %222 = vmatprep.subr.mxu0 0.0
  %223 = vmatpush1.msra.mxu0 0.0
  %224 = vmatprep.mubr.f32.mxu0 0.0
  %225 = vmatmul.mubr.f32.gmra.mrb[0].mxu0 %v155
  %v226 = vpop.f32.mrb[0].mxu0
  %v227 = vadd.f32 %v152, %v226
  %v228 = vpop.f32.mrb[0].mxu0
  %229 = vmatprep.mubr.f32.mxu0 0.0
  %230 = vmatmul.mubr.f32.gmra.mrb[0].mxu0 %v158
  %v231 = vpop.f32.mrb[0].mxu0
  %v232 = vadd.f32 %v152, %v231
  %v233 = vpop.f32.mrb[0].mxu0
  %234 = vdwg.mxu0
  %v235 = vmax.f32 %v227, 0.0
  %v236 = vmax.f32 %v232, 0.0
  %v237 = vand.u32 2147483647, %v227
  %v238 = vand.u32 2147483647, %v232
  %v239 = vsub.f32 0.0, %v237
  %v240 = vsub.f32 0.0, %v238
  %v241 = vmul.f32 %v239, 1.442695
  %v242 = vpow.pop %v241
  %v243 = vmul.f32 %v240, 1.442695
  %v244 = vpow.pop %v243
  %v245 = vadd.f32 %v242, 1.0
  %v246 = vadd.f32 %v244, 1.0
  %v247 = vlog2.pop %v245
  %v248 = vmul.f32 %v247, 0.6931472
  %v249 = vlog2.pop %v246
  %v250 = vmul.f32 %v249, 0.6931472
  %v251 = vadd.f32 %v235, %v248
  %v252 = vadd.f32 %v236, %v250
  %v253 = vsub.f32 %v251, 0.6931472
  %v254 = vsub.f32 %v252, 0.6931472
  %v255 = vld [vmem:[%s5] sm:$0x1]
  %v256 = vld [vmem:[#allocation2] sm:$0x1]
  %v258 = vlaneseq
  %v259 = vshrl.u32 %v258, 7
  %v260 = vsub.s32 0, %v259
  %v261 = vrot.slane %v255, %v260
  %v263 = vmul.f32 %v253, %v261
  %v264 = vmul.f32 %v254, %v261
  %vm265 = vcmask 130048
  %v266 = vsel %vm265, %v263, 0.0
  %267 = vadd.xlane.f32.xlu0 %v266
  %v268 = vpop.xlane.xlu0 %267
  %v269 = vsel %vm265, %v264, 0.0
  %270 = vadd.xlane.f32.xlu0 %v269
  %v271 = vpop.xlane.xlu0 %270
  %v273 = vlaneseq
  %v274 = vshrl.u32 %v273, 7
  %v275 = vsub.s32 0, %v274
  %v276 = vrot.slane %v256, %v275
  %v278 = vadd.f32 %v268, %v276
  %v279 = vadd.f32 %v271, %v276
  %vm280 = vcmask 7168
  %281 = vst.msk [vmem:[%s7] sm:$0xff] %vm280, %v278
  %282 = vst.msk [vmem:[%s7 + $0x8] sm:$0xff] %vm280, %v279
  // Predicated region
  $region30: #{_device_forward.3} parent=0 // pred_check
    _
  $region31: #{_device_forward.3} parent=0 // pred_check_branch
    %284 = sbr.rel (0) target = $region33
  $region32: #{_device_forward.3} parent=0 // pred_region
    _
  $region33: #{_device_forward.3} parent=0 // pred_fallthru
    _
  // Predicated region
  $region34: #{_device_forward.3} parent=0 // pred_check
    _
  $region35: #{_device_forward.3} parent=0 // pred_check_branch
    %286 = sbr.rel (0) target = $region37
  $region36: #{_device_forward.3} parent=0 // pred_region
    _
  $region37: #{_device_forward.3} parent=0 // pred_fallthru
    _

// kernel: neg.1
$region0: #{neg.1}
  #allocation0 [shape = 's32[1]{0}', space=sflag, size = 0x4, scoped, tag = 'scoped memory for neg.1']
  %s0 = inlined_call_operand.vmem [shape: f32[4,3], index: 0, kind: input, shape index: {}]
  %s1 = inlined_call_operand.vmem [shape: f32[4,3], index: 1, kind: output, shape index: {}]
  %v2 = vld [vmem:[%s0] sm:$0xf]
  %3 = xla_tuple %v2
  %4 = xla_tuple %3
  %v5 = vxor.u32 %v2, 2147483648
  %6 = xla_tuple %v5
  %7 = vst [vmem:[%s1] sm:$0xf] %v5

// kernel: _device_forward.4
$region0: #{_device_forward.4}
  #allocation0 [shape = 'u32[]', space=smem, size = 0x4, offset = 0x4, fixed_abs, tag = 'smem constant byte address 0x4 - core index']
  #allocation1 [shape = 'u32[144,128]{1,0:T(1,128)}', space=vmem, size = 0x12000, scoped, tag = 'internal scratch']
  %s0 = inlined_call_operand.vmem [shape: s32[1,128], index: 0, kind: input, shape index: {}]
  %s1 = inlined_call_operand.vmem [shape: f32[128,2], index: 1, kind: input, shape index: {}]
  %s2 = inlined_call_operand.vmem [shape: f32[128,2], index: 2, kind: output, shape index: {}]
  %s3 = sld [smem:[#allocation0]]
  $region22: #{_device_forward.4} parent=0
    _
  %s5 = ssub.s32 1, %s3
  %s6 = scalar_select 0, %s5, %s3
  // Predicated region
  $region2: #{_device_forward.4} parent=0 // pred_check
    _
  $region3: #{_device_forward.4} parent=0 // pred_check_branch
    %8 = sbr.rel (0) target = $region5
  $region4: #{_device_forward.4} parent=0 // pred_region
    _
  $region5: #{_device_forward.4} parent=0 // pred_fallthru
    _
  // Predicated region
  $region6: #{_device_forward.4} parent=0 // pred_check
    _
  $region7: #{_device_forward.4} parent=0 // pred_check_branch
    %10 = sbr.rel (0) target = $region9
  $region8: #{_device_forward.4} parent=0 // pred_region
    _
  $region9: #{_device_forward.4} parent=0 // pred_fallthru
    _
  %p11 = scmp.eq.s32.totalorder 0, 0
  // Predicated region
  $region10: #{_device_forward.4} parent=0 // pred_check
    %p12 = pneg %p11
  $region11: #{_device_forward.4} parent=0 // pred_check_branch
    %14 = sbr.rel (%p12) target = $region13
  $region12: #{_device_forward.4} parent=0 // pred_region
    %vm15 = vcmask 15360
    %16 = vst.msk [vmem:[%s2] sm:$0xff] %vm15, 0.0
    %17 = vst.msk [vmem:[%s2 + $0x8] sm:$0xff] %vm15, 0.0
    %18 = vst.msk [vmem:[%s2 + $0x10] sm:$0xff] %vm15, 0.0
    %19 = vst.msk [vmem:[%s2 + $0x18] sm:$0xff] %vm15, 0.0
    %20 = vst.msk [vmem:[%s2 + $0x20] sm:$0xff] %vm15, 0.0
    %21 = vst.msk [vmem:[%s2 + $0x28] sm:$0xff] %vm15, 0.0
    %22 = vst.msk [vmem:[%s2 + $0x30] sm:$0xff] %vm15, 0.0
    %23 = vst.msk [vmem:[%s2 + $0x38] sm:$0xff] %vm15, 0.0
    %24 = vst.msk [vmem:[%s2 + $0x40] sm:$0xff] %vm15, 0.0
    %25 = vst.msk [vmem:[%s2 + $0x48] sm:$0xff] %vm15, 0.0
    %26 = vst.msk [vmem:[%s2 + $0x50] sm:$0xff] %vm15, 0.0
    %27 = vst.msk [vmem:[%s2 + $0x58] sm:$0xff] %vm15, 0.0
    %28 = vst.msk [vmem:[%s2 + $0x60] sm:$0xff] %vm15, 0.0
    %29 = vst.msk [vmem:[%s2 + $0x68] sm:$0xff] %vm15, 0.0
    %30 = vst.msk [vmem:[%s2 + $0x70] sm:$0xff] %vm15, 0.0
    %31 = vst.msk [vmem:[%s2 + $0x78] sm:$0xff] %vm15, 0.0
  $region13: #{_device_forward.4} parent=0 // pred_fallthru
    _
  %s32 = smul.u32 0, 128
  %v33 = vlaneseq
  %v34 = vshrl.u32 %v33, 7
  %v35 = vadd.s32 %v34, 8
  %v36 = vadd.s32 %v34, 16
  %v37 = vadd.s32 %v34, 24
  %v38 = vadd.s32 %v34, 32
  %v39 = vadd.s32 %v34, 40
  %v40 = vadd.s32 %v34, 48
  %v41 = vadd.s32 %v34, 56
  %v42 = vadd.s32 %v34, 64
  %v43 = vadd.s32 %v34, 72
  %v44 = vadd.s32 %v34, 80
  %v45 = vadd.s32 %v34, 88
  %v46 = vadd.s32 %v34, 96
  %v47 = vadd.s32 %v34, 104
  %v48 = vadd.s32 %v34, 112
  %v49 = vadd.s32 %v34, 120
  %v50 = vstv %s32
  %v51 = vadd.s32 %v34, %v50
  %v52 = vadd.s32 %v35, %v50
  %v53 = vadd.s32 %v36, %v50
  %v54 = vadd.s32 %v37, %v50
  %v55 = vadd.s32 %v38, %v50
  %v56 = vadd.s32 %v39, %v50
  %v57 = vadd.s32 %v40, %v50
  %v58 = vadd.s32 %v41, %v50
  %v59 = vadd.s32 %v42, %v50
  %v60 = vadd.s32 %v43, %v50
  %v61 = vadd.s32 %v44, %v50
  %v62 = vadd.s32 %v45, %v50
  %v63 = vadd.s32 %v46, %v50
  %v64 = vadd.s32 %v47, %v50
  %v65 = vadd.s32 %v48, %v50
  %v66 = vadd.s32 %v49, %v50
  %v67 = vld [vmem:[%s0] sm:$0x1]
  %v68 = vlaneseq
  %v69 = vshrl.u32 %v68, 7
  %v70 = vsub.s32 0, %v69
  %v71 = vrot.slane %v67, %v70
  %vm72 = vcmp.eq.s32.totalorder %v51, %v71
  %vm73 = vcmp.eq.s32.totalorder %v52, %v71
  %vm74 = vcmp.eq.s32.totalorder %v53, %v71
  %vm75 = vcmp.eq.s32.totalorder %v54, %v71
  %vm76 = vcmp.eq.s32.totalorder %v55, %v71
  %vm77 = vcmp.eq.s32.totalorder %v56, %v71
  %vm78 = vcmp.eq.s32.totalorder %v57, %v71
  %vm79 = vcmp.eq.s32.totalorder %v58, %v71
  %vm80 = vcmp.eq.s32.totalorder %v59, %v71
  %vm81 = vcmp.eq.s32.totalorder %v60, %v71
  %vm82 = vcmp.eq.s32.totalorder %v61, %v71
  %vm83 = vcmp.eq.s32.totalorder %v62, %v71
  %vm84 = vcmp.eq.s32.totalorder %v63, %v71
  %vm85 = vcmp.eq.s32.totalorder %v64, %v71
  %vm86 = vcmp.eq.s32.totalorder %v65, %v71
  %vm87 = vcmp.eq.s32.totalorder %v66, %v71
  %v88 = vsel %vm72, 1, 0
  %v89 = vsel %vm73, 1, 0
  %v90 = vsel %vm74, 1, 0
  %v91 = vsel %vm75, 1, 0
  %v92 = vsel %vm76, 1, 0
  %v93 = vsel %vm77, 1, 0
  %v94 = vsel %vm78, 1, 0
  %v95 = vsel %vm79, 1, 0
  %v96 = vsel %vm80, 1, 0
  %v97 = vsel %vm81, 1, 0
  %v98 = vsel %vm82, 1, 0
  %v99 = vsel %vm83, 1, 0
  %v100 = vsel %vm84, 1, 0
  %v101 = vsel %vm85, 1, 0
  %v102 = vsel %vm86, 1, 0
  %v103 = vsel %vm87, 1, 0
  %v104 = vcvt.s32.f32 %v88
  %v105 = vcvt.s32.f32 %v89
  %v106 = vcvt.s32.f32 %v90
  %v107 = vcvt.s32.f32 %v91
  %v108 = vcvt.s32.f32 %v92
  %v109 = vcvt.s32.f32 %v93
  %v110 = vcvt.s32.f32 %v94
  %v111 = vcvt.s32.f32 %v95
  %v112 = vcvt.s32.f32 %v96
  %v113 = vcvt.s32.f32 %v97
  %v114 = vcvt.s32.f32 %v98
  %v115 = vcvt.s32.f32 %v99
  %v116 = vcvt.s32.f32 %v100
  %v117 = vcvt.s32.f32 %v101
  %v118 = vcvt.s32.f32 %v102
  %v119 = vcvt.s32.f32 %v103
  %v120 = vld [vmem:[%s2] sm:$0xff]
  %v121 = vld [vmem:[%s2 + $0x8] sm:$0xff]
  %v122 = vld [vmem:[%s2 + $0x10] sm:$0xff]
  %v123 = vld [vmem:[%s2 + $0x18] sm:$0xff]
  %v124 = vld [vmem:[%s2 + $0x20] sm:$0xff]
  %v125 = vld [vmem:[%s2 + $0x28] sm:$0xff]
  %v126 = vld [vmem:[%s2 + $0x30] sm:$0xff]
  %v127 = vld [vmem:[%s2 + $0x38] sm:$0xff]
  %v128 = vld [vmem:[%s2 + $0x40] sm:$0xff]
  %v129 = vld [vmem:[%s2 + $0x48] sm:$0xff]
  %v130 = vld [vmem:[%s2 + $0x50] sm:$0xff]
  %v131 = vld [vmem:[%s2 + $0x58] sm:$0xff]
  %v132 = vld [vmem:[%s2 + $0x60] sm:$0xff]
  %v133 = vld [vmem:[%s2 + $0x68] sm:$0xff]
  %v134 = vld [vmem:[%s2 + $0x70] sm:$0xff]
  %v135 = vld [vmem:[%s2 + $0x78] sm:$0xff]
  %v136 = vld [vmem:[%s1] sm:$0xff]
  %v137 = vld [vmem:[%s1 + $0x8] sm:$0xff]
  %v138 = vld [vmem:[%s1 + $0x10] sm:$0xff]
  %v139 = vld [vmem:[%s1 + $0x18] sm:$0xff]
  %v140 = vld [vmem:[%s1 + $0x20] sm:$0xff]
  %v141 = vld [vmem:[%s1 + $0x28] sm:$0xff]
  %v142 = vld [vmem:[%s1 + $0x30] sm:$0xff]
  %v143 = vld [vmem:[%s1 + $0x38] sm:$0xff]
  %v144 = vld [vmem:[%s1 + $0x40] sm:$0xff]
  %v145 = vld [vmem:[%s1 + $0x48] sm:$0xff]
  %v146 = vld [vmem:[%s1 + $0x50] sm:$0xff]
  %v147 = vld [vmem:[%s1 + $0x58] sm:$0xff]
  %v148 = vld [vmem:[%s1 + $0x60] sm:$0xff]
  %v149 = vld [vmem:[%s1 + $0x68] sm:$0xff]
  %v150 = vld [vmem:[%s1 + $0x70] sm:$0xff]
  %v151 = vld [vmem:[%s1 + $0x78] sm:$0xff]
  %152 = vmatprep.subr.mxu0 0.0
  %153 = vmatpush1.msra.mxu0 %v136
  %154 = vmatprep.subr.mxu0 0.0
  %155 = vmatpush1.msra.mxu0 %v137
  %156 = vmatprep.subr.mxu0 0.0
  %157 = vmatpush1.msra.mxu0 %v138
  %158 = vmatprep.subr.mxu0 0.0
  %159 = vmatpush1.msra.mxu0 %v139
  %160 = vmatprep.subr.mxu0 0.0
  %161 = vmatpush1.msra.mxu0 %v140
  %162 = vmatprep.subr.mxu0 0.0
  %163 = vmatpush1.msra.mxu0 %v141
  %164 = vmatprep.subr.mxu0 0.0
  %165 = vmatpush1.msra.mxu0 %v142
  %166 = vmatprep.subr.mxu0 0.0
  %167 = vmatpush1.msra.mxu0 %v143
  %168 = vmatprep.subr.mxu0 0.0
  %169 = vmatpush1.msra.mxu0 %v144
  %170 = vmatprep.subr.mxu0 0.0
  %171 = vmatpush1.msra.mxu0 %v145
  %172 = vmatprep.subr.mxu0 0.0
  %173 = vmatpush1.msra.mxu0 %v146
  %174 = vmatprep.subr.mxu0 0.0
  %175 = vmatpush1.msra.mxu0 %v147
  %176 = vmatprep.subr.mxu0 0.0
  %177 = vmatpush1.msra.mxu0 %v148
  %178 = vmatprep.subr.mxu0 0.0
  %179 = vmatpush1.msra.mxu0 %v149
  %180 = vmatprep.subr.mxu0 0.0
  %181 = vmatpush1.msra.mxu0 %v150
  %182 = vmatprep.subr.mxu0 0.0
  %183 = vmatpush1.msra.mxu0 %v151
  %184 = vmatprep.subr.mxu0 0.0
  %185 = vmatpush1.msra.mxu0 0.0
  %186 = vmatprep.subr.mxu0 0.0
  %187 = vmatpush1.msra.mxu0 0.0
  %188 = vmatprep.subr.mxu0 0.0
  %189 = vmatpush1.msra.mxu0 0.0
  %190 = vmatprep.subr.mxu0 0.0
  %191 = vmatpush1.msra.mxu0 0.0
  %192 = vmatprep.subr.mxu0 0.0
  %193 = vmatpush1.msra.mxu0 0.0
  %194 = vmatprep.subr.mxu0 0.0
  %195 = vmatpush1.msra.mxu0 0.0
  %196 = vmatprep.subr.mxu0 0.0
  %197 = vmatpush1.msra.mxu0 0.0
  %198 = vmatprep.subr.mxu0 0.0
  %199 = vmatpush1.msra.mxu0 0.0
  %200 = vmatprep.subr.mxu0 0.0
  %201 = vmatpush1.msra.mxu0 0.0
  %202 = vmatprep.subr.mxu0 0.0
  %203 = vmatpush1.msra.mxu0 0.0
  %204 = vmatprep.subr.mxu0 0.0
  %205 = vmatpush1.msra.mxu0 0.0
  %206 = vmatprep.subr.mxu0 0.0
  %207 = vmatpush1.msra.mxu0 0.0
  %208 = vmatprep.subr.mxu0 0.0
  %209 = vmatpush1.msra.mxu0 0.0
  %210 = vmatprep.subr.mxu0 0.0
  %211 = vmatpush1.msra.mxu0 0.0
  %212 = vmatprep.subr.mxu0 0.0
  %213 = vmatpush1.msra.mxu0 0.0
  %214 = vmatprep.subr.mxu0 0.0
  %215 = vmatpush1.msra.mxu0 0.0
  %216 = vmatprep.mubr.f32.mxu0 0.0
  %217 = vmatmul.mubr.f32.gmra.mrb[0].mxu0 %v104
  %v218 = vpop.f32.mrb[0].mxu0
  %v219 = vadd.f32 0.0, %v218
  %v220 = vpop.f32.mrb[0].mxu0
  %221 = vmatprep.mubr.f32.mxu0 0.0
  %222 = vmatmul.mubr.f32.gmra.mrb[0].mxu0 %v105
  %v223 = vpop.f32.mrb[0].mxu0
  %v224 = vadd.f32 0.0, %v223
  %v225 = vpop.f32.mrb[0].mxu0
  %226 = vmatprep.mubr.f32.mxu0 0.0
  %227 = vmatmul.mubr.f32.gmra.mrb[0].mxu0 %v106
  %v228 = vpop.f32.mrb[0].mxu0
  %v229 = vadd.f32 0.0, %v228
  %v230 = vpop.f32.mrb[0].mxu0
  %231 = vmatprep.mubr.f32.mxu0 0.0
  %232 = vmatmul.mubr.f32.gmra.mrb[0].mxu0 %v107
  %v233 = vpop.f32.mrb[0].mxu0
  %v234 = vadd.f32 0.0, %v233
  %v235 = vpop.f32.mrb[0].mxu0
  %236 = vmatprep.mubr.f32.mxu0 0.0
  %237 = vmatmul.mubr.f32.gmra.mrb[0].mxu0 %v108
  %v238 = vpop.f32.mrb[0].mxu0
  %v239 = vadd.f32 0.0, %v238
  %v240 = vpop.f32.mrb[0].mxu0
  %241 = vmatprep.mubr.f32.mxu0 0.0
  %242 = vmatmul.mubr.f32.gmra.mrb[0].mxu0 %v109
  %v243 = vpop.f32.mrb[0].mxu0
  %v244 = vadd.f32 0.0, %v243
  %v245 = vpop.f32.mrb[0].mxu0
  %246 = vmatprep.mubr.f32.mxu0 0.0
  %247 = vmatmul.mubr.f32.gmra.mrb[0].mxu0 %v110
  %v248 = vpop.f32.mrb[0].mxu0
  %v249 = vadd.f32 0.0, %v248
  %v250 = vpop.f32.mrb[0].mxu0
  %251 = vmatprep.mubr.f32.mxu0 0.0
  %252 = vmatmul.mubr.f32.gmra.mrb[0].mxu0 %v111
  %v253 = vpop.f32.mrb[0].mxu0
  %v254 = vadd.f32 0.0, %v253
  %v255 = vpop.f32.mrb[0].mxu0
  %256 = vmatprep.mubr.f32.mxu0 0.0
  %257 = vmatmul.mubr.f32.gmra.mrb[0].mxu0 %v112
  %v258 = vpop.f32.mrb[0].mxu0
  %v259 = vadd.f32 0.0, %v258
  %v260 = vpop.f32.mrb[0].mxu0
  %261 = vmatprep.mubr.f32.mxu0 0.0
  %262 = vmatmul.mubr.f32.gmra.mrb[0].mxu0 %v113
  %v263 = vpop.f32.mrb[0].mxu0
  %v264 = vadd.f32 0.0, %v263
  %v265 = vpop.f32.mrb[0].mxu0
  %266 = vmatprep.mubr.f32.mxu0 0.0
  %267 = vmatmul.mubr.f32.gmra.mrb[0].mxu0 %v114
  %v268 = vpop.f32.mrb[0].mxu0
  %v269 = vadd.f32 0.0, %v268
  %v270 = vpop.f32.mrb[0].mxu0
  %271 = vmatprep.mubr.f32.mxu0 0.0
  %272 = vmatmul.mubr.f32.gmra.mrb[0].mxu0 %v115
  %v273 = vpop.f32.mrb[0].mxu0
  %v274 = vadd.f32 0.0, %v273
  %v275 = vpop.f32.mrb[0].mxu0
  %276 = vmatprep.mubr.f32.mxu0 0.0
  %277 = vmatmul.mubr.f32.gmra.mrb[0].mxu0 %v116
  %v278 = vpop.f32.mrb[0].mxu0
  %v279 = vadd.f32 0.0, %v278
  %v280 = vpop.f32.mrb[0].mxu0
  %281 = vmatprep.mubr.f32.mxu0 0.0
  %282 = vmatmul.mubr.f32.gmra.mrb[0].mxu0 %v117
  %v283 = vpop.f32.mrb[0].mxu0
  %v284 = vadd.f32 0.0, %v283
  %v285 = vpop.f32.mrb[0].mxu0
  %286 = vmatprep.mubr.f32.mxu0 0.0
  %287 = vmatmul.mubr.f32.gmra.mrb[0].mxu0 %v118
  %v288 = vpop.f32.mrb[0].mxu0
  %v289 = vadd.f32 0.0, %v288
  %v290 = vpop.f32.mrb[0].mxu0
  %291 = vmatprep.mubr.f32.mxu0 0.0
  %292 = vmatmul.mubr.f32.gmra.mrb[0].mxu0 %v119
  %v293 = vpop.f32.mrb[0].mxu0
  %v294 = vadd.f32 0.0, %v293
  %v295 = vpop.f32.mrb[0].mxu0
  %296 = vdwg.mxu0
  %v297 = vadd.f32 %v120, %v219
  %v298 = vadd.f32 %v121, %v224
  %v299 = vadd.f32 %v122, %v229
  %v300 = vadd.f32 %v123, %v234
  %v301 = vadd.f32 %v124, %v239
  %v302 = vadd.f32 %v125, %v244
  %v303 = vadd.f32 %v126, %v249
  %v304 = vadd.f32 %v127, %v254
  %v305 = vadd.f32 %v128, %v259
  %v306 = vadd.f32 %v129, %v264
  %v307 = vadd.f32 %v130, %v269
  %v308 = vadd.f32 %v131, %v274
  %v309 = vadd.f32 %v132, %v279
  %v310 = vadd.f32 %v133, %v284
  %v311 = vadd.f32 %v134, %v289
  %v312 = vadd.f32 %v135, %v294
  %vm313 = vcmask 15360
  %314 = vst.msk [vmem:[%s2] sm:$0xff] %vm313, %v297
  %315 = vst.msk [vmem:[%s2 + $0x8] sm:$0xff] %vm313, %v298
  %316 = vst.msk [vmem:[%s2 + $0x10] sm:$0xff] %vm313, %v299
  %317 = vst.msk [vmem:[%s2 + $0x18] sm:$0xff] %vm313, %v300
  %318 = vst.msk [vmem:[%s2 + $0x20] sm:$0xff] %vm313, %v301
  %319 = vst.msk [vmem:[%s2 + $0x28] sm:$0xff] %vm313, %v302
  %320 = vst.msk [vmem:[%s2 + $0x30] sm:$0xff] %vm313, %v303
  %321 = vst.msk [vmem:[%s2 + $0x38] sm:$0xff] %vm313, %v304
  %322 = vst.msk [vmem:[%s2 + $0x40] sm:$0xff] %vm313, %v305
  %323 = vst.msk [vmem:[%s2 + $0x48] sm:$0xff] %vm313, %v306
  %324 = vst.msk [vmem:[%s2 + $0x50] sm:$0xff] %vm313, %v307
  %325 = vst.msk [vmem:[%s2 + $0x58] sm:$0xff] %vm313, %v308
  %326 = vst.msk [vmem:[%s2 + $0x60] sm:$0xff] %vm313, %v309
  %327 = vst.msk [vmem:[%s2 + $0x68] sm:$0xff] %vm313, %v310
  %328 = vst.msk [vmem:[%s2 + $0x70] sm:$0xff] %vm313, %v311
  %329 = vst.msk [vmem:[%s2 + $0x78] sm:$0xff] %vm313, %v312
  // Predicated region
  $region14: #{_device_forward.4} parent=0 // pred_check
    _
  $region15: #{_device_forward.4} parent=0 // pred_check_branch
    %331 = sbr.rel (0) target = $region17
  $region16: #{_device_forward.4} parent=0 // pred_region
    _
  $region17: #{_device_forward.4} parent=0 // pred_fallthru
    _
  // Predicated region
  $region18: #{_device_forward.4} parent=0 // pred_check
    _
  $region19: #{_device_forward.4} parent=0 // pred_check_branch
    %333 = sbr.rel (0) target = $region21
  $region20: #{_device_forward.4} parent=0 // pred_region
    _
  $region21: #{_device_forward.4} parent=0 // pred_fallthru
    _

// kernel: _device_forward.5
$region0: #{_device_forward.5}
  #allocation0 [shape = 'u32[]', space=smem, size = 0x4, offset = 0x4, fixed_abs, tag = 'smem constant byte address 0x4 - core index']
  #allocation1 [shape = 'u32[144,128]{1,0:T(1,128)}', space=vmem, size = 0x12000, scoped, tag = 'internal scratch']
  %s0 = inlined_call_operand.vmem [shape: s32[1,128], index: 0, kind: input, shape index: {}]
  %s1 = inlined_call_operand.vmem [shape: f32[128,3], index: 1, kind: input, shape index: {}]
  %s2 = inlined_call_operand.vmem [shape: f32[128,3], index: 2, kind: output, shape index: {}]
  %s3 = sld [smem:[#allocation0]]
  $region22: #{_device_forward.5} parent=0
    _
  %s5 = ssub.s32 1, %s3
  %s6 = scalar_select 0, %s5, %s3
  // Predicated region
  $region2: #{_device_forward.5} parent=0 // pred_check
    _
  $region3: #{_device_forward.5} parent=0 // pred_check_branch
    %8 = sbr.rel (0) target = $region5
  $region4: #{_device_forward.5} parent=0 // pred_region
    _
  $region5: #{_device_forward.5} parent=0 // pred_fallthru
    _
  // Predicated region
  $region6: #{_device_forward.5} parent=0 // pred_check
    _
  $region7: #{_device_forward.5} parent=0 // pred_check_branch
    %10 = sbr.rel (0) target = $region9
  $region8: #{_device_forward.5} parent=0 // pred_region
    _
  $region9: #{_device_forward.5} parent=0 // pred_fallthru
    _
  %p11 = scmp.eq.s32.totalorder 0, 0
  // Predicated region
  $region10: #{_device_forward.5} parent=0 // pred_check
    %p12 = pneg %p11
  $region11: #{_device_forward.5} parent=0 // pred_check_branch
    %14 = sbr.rel (%p12) target = $region13
  $region12: #{_device_forward.5} parent=0 // pred_region
    %vm15 = vcmask 23552
    %16 = vst.msk [vmem:[%s2] sm:$0xff] %vm15, 0.0
    %17 = vst.msk [vmem:[%s2 + $0x8] sm:$0xff] %vm15, 0.0
    %18 = vst.msk [vmem:[%s2 + $0x10] sm:$0xff] %vm15, 0.0
    %19 = vst.msk [vmem:[%s2 + $0x18] sm:$0xff] %vm15, 0.0
    %20 = vst.msk [vmem:[%s2 + $0x20] sm:$0xff] %vm15, 0.0
    %21 = vst.msk [vmem:[%s2 + $0x28] sm:$0xff] %vm15, 0.0
    %22 = vst.msk [vmem:[%s2 + $0x30] sm:$0xff] %vm15, 0.0
    %23 = vst.msk [vmem:[%s2 + $0x38] sm:$0xff] %vm15, 0.0
    %24 = vst.msk [vmem:[%s2 + $0x40] sm:$0xff] %vm15, 0.0
    %25 = vst.msk [vmem:[%s2 + $0x48] sm:$0xff] %vm15, 0.0
    %26 = vst.msk [vmem:[%s2 + $0x50] sm:$0xff] %vm15, 0.0
    %27 = vst.msk [vmem:[%s2 + $0x58] sm:$0xff] %vm15, 0.0
    %28 = vst.msk [vmem:[%s2 + $0x60] sm:$0xff] %vm15, 0.0
    %29 = vst.msk [vmem:[%s2 + $0x68] sm:$0xff] %vm15, 0.0
    %30 = vst.msk [vmem:[%s2 + $0x70] sm:$0xff] %vm15, 0.0
    %31 = vst.msk [vmem:[%s2 + $0x78] sm:$0xff] %vm15, 0.0
  $region13: #{_device_forward.5} parent=0 // pred_fallthru
    _
  %s32 = smul.u32 0, 128
  %v33 = vlaneseq
  %v34 = vshrl.u32 %v33, 7
  %v35 = vadd.s32 %v34, 8
  %v36 = vadd.s32 %v34, 16
  %v37 = vadd.s32 %v34, 24
  %v38 = vadd.s32 %v34, 32
  %v39 = vadd.s32 %v34, 40
  %v40 = vadd.s32 %v34, 48
  %v41 = vadd.s32 %v34, 56
  %v42 = vadd.s32 %v34, 64
  %v43 = vadd.s32 %v34, 72
  %v44 = vadd.s32 %v34, 80
  %v45 = vadd.s32 %v34, 88
  %v46 = vadd.s32 %v34, 96
  %v47 = vadd.s32 %v34, 104
  %v48 = vadd.s32 %v34, 112
  %v49 = vadd.s32 %v34, 120
  %v50 = vstv %s32
  %v51 = vadd.s32 %v34, %v50
  %v52 = vadd.s32 %v35, %v50
  %v53 = vadd.s32 %v36, %v50
  %v54 = vadd.s32 %v37, %v50
  %v55 = vadd.s32 %v38, %v50
  %v56 = vadd.s32 %v39, %v50
  %v57 = vadd.s32 %v40, %v50
  %v58 = vadd.s32 %v41, %v50
  %v59 = vadd.s32 %v42, %v50
  %v60 = vadd.s32 %v43, %v50
  %v61 = vadd.s32 %v44, %v50
  %v62 = vadd.s32 %v45, %v50
  %v63 = vadd.s32 %v46, %v50
  %v64 = vadd.s32 %v47, %v50
  %v65 = vadd.s32 %v48, %v50
  %v66 = vadd.s32 %v49, %v50
  %v67 = vld [vmem:[%s0] sm:$0x1]
  %v68 = vlaneseq
  %v69 = vshrl.u32 %v68, 7
  %v70 = vsub.s32 0, %v69
  %v71 = vrot.slane %v67, %v70
  %vm72 = vcmp.eq.s32.totalorder %v51, %v71
  %vm73 = vcmp.eq.s32.totalorder %v52, %v71
  %vm74 = vcmp.eq.s32.totalorder %v53, %v71
  %vm75 = vcmp.eq.s32.totalorder %v54, %v71
  %vm76 = vcmp.eq.s32.totalorder %v55, %v71
  %vm77 = vcmp.eq.s32.totalorder %v56, %v71
  %vm78 = vcmp.eq.s32.totalorder %v57, %v71
  %vm79 = vcmp.eq.s32.totalorder %v58, %v71
  %vm80 = vcmp.eq.s32.totalorder %v59, %v71
  %vm81 = vcmp.eq.s32.totalorder %v60, %v71
  %vm82 = vcmp.eq.s32.totalorder %v61, %v71
  %vm83 = vcmp.eq.s32.totalorder %v62, %v71
  %vm84 = vcmp.eq.s32.totalorder %v63, %v71
  %vm85 = vcmp.eq.s32.totalorder %v64, %v71
  %vm86 = vcmp.eq.s32.totalorder %v65, %v71
  %vm87 = vcmp.eq.s32.totalorder %v66, %v71
  %v88 = vsel %vm72, 1, 0
  %v89 = vsel %vm73, 1, 0
  %v90 = vsel %vm74, 1, 0
  %v91 = vsel %vm75, 1, 0
  %v92 = vsel %vm76, 1, 0
  %v93 = vsel %vm77, 1, 0
  %v94 = vsel %vm78, 1, 0
  %v95 = vsel %vm79, 1, 0
  %v96 = vsel %vm80, 1, 0
  %v97 = vsel %vm81, 1, 0
  %v98 = vsel %vm82, 1, 0
  %v99 = vsel %vm83, 1, 0
  %v100 = vsel %vm84, 1, 0
  %v101 = vsel %vm85, 1, 0
  %v102 = vsel %vm86, 1, 0
  %v103 = vsel %vm87, 1, 0
  %v104 = vcvt.s32.f32 %v88
  %v105 = vcvt.s32.f32 %v89
  %v106 = vcvt.s32.f32 %v90
  %v107 = vcvt.s32.f32 %v91
  %v108 = vcvt.s32.f32 %v92
  %v109 = vcvt.s32.f32 %v93
  %v110 = vcvt.s32.f32 %v94
  %v111 = vcvt.s32.f32 %v95
  %v112 = vcvt.s32.f32 %v96
  %v113 = vcvt.s32.f32 %v97
  %v114 = vcvt.s32.f32 %v98
  %v115 = vcvt.s32.f32 %v99
  %v116 = vcvt.s32.f32 %v100
  %v117 = vcvt.s32.f32 %v101
  %v118 = vcvt.s32.f32 %v102
  %v119 = vcvt.s32.f32 %v103
  %v120 = vld [vmem:[%s2] sm:$0xff]
  %v121 = vld [vmem:[%s2 + $0x8] sm:$0xff]
  %v122 = vld [vmem:[%s2 + $0x10] sm:$0xff]
  %v123 = vld [vmem:[%s2 + $0x18] sm:$0xff]
  %v124 = vld [vmem:[%s2 + $0x20] sm:$0xff]
  %v125 = vld [vmem:[%s2 + $0x28] sm:$0xff]
  %v126 = vld [vmem:[%s2 + $0x30] sm:$0xff]
  %v127 = vld [vmem:[%s2 + $0x38] sm:$0xff]
  %v128 = vld [vmem:[%s2 + $0x40] sm:$0xff]
  %v129 = vld [vmem:[%s2 + $0x48] sm:$0xff]
  %v130 = vld [vmem:[%s2 + $0x50] sm:$0xff]
  %v131 = vld [vmem:[%s2 + $0x58] sm:$0xff]
  %v132 = vld [vmem:[%s2 + $0x60] sm:$0xff]
  %v133 = vld [vmem:[%s2 + $0x68] sm:$0xff]
  %v134 = vld [vmem:[%s2 + $0x70] sm:$0xff]
  %v135 = vld [vmem:[%s2 + $0x78] sm:$0xff]
  %v136 = vld [vmem:[%s1] sm:$0xff]
  %v137 = vld [vmem:[%s1 + $0x8] sm:$0xff]
  %v138 = vld [vmem:[%s1 + $0x10] sm:$0xff]
  %v139 = vld [vmem:[%s1 + $0x18] sm:$0xff]
  %v140 = vld [vmem:[%s1 + $0x20] sm:$0xff]
  %v141 = vld [vmem:[%s1 + $0x28] sm:$0xff]
  %v142 = vld [vmem:[%s1 + $0x30] sm:$0xff]
  %v143 = vld [vmem:[%s1 + $0x38] sm:$0xff]
  %v144 = vld [vmem:[%s1 + $0x40] sm:$0xff]
  %v145 = vld [vmem:[%s1 + $0x48] sm:$0xff]
  %v146 = vld [vmem:[%s1 + $0x50] sm:$0xff]
  %v147 = vld [vmem:[%s1 + $0x58] sm:$0xff]
  %v148 = vld [vmem:[%s1 + $0x60] sm:$0xff]
  %v149 = vld [vmem:[%s1 + $0x68] sm:$0xff]
  %v150 = vld [vmem:[%s1 + $0x70] sm:$0xff]
  %v151 = vld [vmem:[%s1 + $0x78] sm:$0xff]
  %152 = vmatprep.subr.mxu0 0.0
  %153 = vmatpush1.msra.mxu0 %v136
  %154 = vmatprep.subr.mxu0 0.0
  %155 = vmatpush1.msra.mxu0 %v137
  %156 = vmatprep.subr.mxu0 0.0
  %157 = vmatpush1.msra.mxu0 %v138
  %158 = vmatprep.subr.mxu0 0.0
  %159 = vmatpush1.msra.mxu0 %v139
  %160 = vmatprep.subr.mxu0 0.0
  %161 = vmatpush1.msra.mxu0 %v140
  %162 = vmatprep.subr.mxu0 0.0
  %163 = vmatpush1.msra.mxu0 %v141
  %164 = vmatprep.subr.mxu0 0.0
  %165 = vmatpush1.msra.mxu0 %v142
  %166 = vmatprep.subr.mxu0 0.0
  %167 = vmatpush1.msra.mxu0 %v143
  %168 = vmatprep.subr.mxu0 0.0
  %169 = vmatpush1.msra.mxu0 %v144
  %170 = vmatprep.subr.mxu0 0.0
  %171 = vmatpush1.msra.mxu0 %v145
  %172 = vmatprep.subr.mxu0 0.0
  %173 = vmatpush1.msra.mxu0 %v146
  %174 = vmatprep.subr.mxu0 0.0
  %175 = vmatpush1.msra.mxu0 %v147
  %176 = vmatprep.subr.mxu0 0.0
  %177 = vmatpush1.msra.mxu0 %v148
  %178 = vmatprep.subr.mxu0 0.0
  %179 = vmatpush1.msra.mxu0 %v149
  %180 = vmatprep.subr.mxu0 0.0
  %181 = vmatpush1.msra.mxu0 %v150
  %182 = vmatprep.subr.mxu0 0.0
  %183 = vmatpush1.msra.mxu0 %v151
  %184 = vmatprep.subr.mxu0 0.0
  %185 = vmatpush1.msra.mxu0 0.0
  %186 = vmatprep.subr.mxu0 0.0
  %187 = vmatpush1.msra.mxu0 0.0
  %188 = vmatprep.subr.mxu0 0.0
  %189 = vmatpush1.msra.mxu0 0.0
  %190 = vmatprep.subr.mxu0 0.0
  %191 = vmatpush1.msra.mxu0 0.0
  %192 = vmatprep.subr.mxu0 0.0
  %193 = vmatpush1.msra.mxu0 0.0
  %194 = vmatprep.subr.mxu0 0.0
  %195 = vmatpush1.msra.mxu0 0.0
  %196 = vmatprep.subr.mxu0 0.0
  %197 = vmatpush1.msra.mxu0 0.0
  %198 = vmatprep.subr.mxu0 0.0
  %199 = vmatpush1.msra.mxu0 0.0
  %200 = vmatprep.subr.mxu0 0.0
  %201 = vmatpush1.msra.mxu0 0.0
  %202 = vmatprep.subr.mxu0 0.0
  %203 = vmatpush1.msra.mxu0 0.0
  %204 = vmatprep.subr.mxu0 0.0
  %205 = vmatpush1.msra.mxu0 0.0
  %206 = vmatprep.subr.mxu0 0.0
  %207 = vmatpush1.msra.mxu0 0.0
  %208 = vmatprep.subr.mxu0 0.0
  %209 = vmatpush1.msra.mxu0 0.0
  %210 = vmatprep.subr.mxu0 0.0
  %211 = vmatpush1.msra.mxu0 0.0
  %212 = vmatprep.subr.mxu0 0.0
  %213 = vmatpush1.msra.mxu0 0.0
  %214 = vmatprep.subr.mxu0 0.0
  %215 = vmatpush1.msra.mxu0 0.0
  %216 = vmatprep.mubr.f32.mxu0 0.0
  %217 = vmatmul.mubr.f32.gmra.mrb[0].mxu0 %v104
  %v218 = vpop.f32.mrb[0].mxu0
  %v219 = vadd.f32 0.0, %v218
  %v220 = vpop.f32.mrb[0].mxu0
  %221 = vmatprep.mubr.f32.mxu0 0.0
  %222 = vmatmul.mubr.f32.gmra.mrb[0].mxu0 %v105
  %v223 = vpop.f32.mrb[0].mxu0
  %v224 = vadd.f32 0.0, %v223
  %v225 = vpop.f32.mrb[0].mxu0
  %226 = vmatprep.mubr.f32.mxu0 0.0
  %227 = vmatmul.mubr.f32.gmra.mrb[0].mxu0 %v106
  %v228 = vpop.f32.mrb[0].mxu0
  %v229 = vadd.f32 0.0, %v228
  %v230 = vpop.f32.mrb[0].mxu0
  %231 = vmatprep.mubr.f32.mxu0 0.0
  %232 = vmatmul.mubr.f32.gmra.mrb[0].mxu0 %v107
  %v233 = vpop.f32.mrb[0].mxu0
  %v234 = vadd.f32 0.0, %v233
  %v235 = vpop.f32.mrb[0].mxu0
  %236 = vmatprep.mubr.f32.mxu0 0.0
  %237 = vmatmul.mubr.f32.gmra.mrb[0].mxu0 %v108
  %v238 = vpop.f32.mrb[0].mxu0
  %v239 = vadd.f32 0.0, %v238
  %v240 = vpop.f32.mrb[0].mxu0
  %241 = vmatprep.mubr.f32.mxu0 0.0
  %242 = vmatmul.mubr.f32.gmra.mrb[0].mxu0 %v109
  %v243 = vpop.f32.mrb[0].mxu0
  %v244 = vadd.f32 0.0, %v243
  %v245 = vpop.f32.mrb[0].mxu0
  %246 = vmatprep.mubr.f32.mxu0 0.0
  %247 = vmatmul.mubr.f32.gmra.mrb[0].mxu0 %v110
  %v248 = vpop.f32.mrb[0].mxu0
  %v249 = vadd.f32 0.0, %v248
  %v250 = vpop.f32.mrb[0].mxu0
  %251 = vmatprep.mubr.f32.mxu0 0.0
  %252 = vmatmul.mubr.f32.gmra.mrb[0].mxu0 %v111
  %v253 = vpop.f32.mrb[0].mxu0
  %v254 = vadd.f32 0.0, %v253
  %v255 = vpop.f32.mrb[0].mxu0
  %256 = vmatprep.mubr.f32.mxu0 0.0
  %257 = vmatmul.mubr.f32.gmra.mrb[0].mxu0 %v112
  %v258 = vpop.f32.mrb[0].mxu0
  %v259 = vadd.f32 0.0, %v258
  %v260 = vpop.f32.mrb[0].mxu0
  %261 = vmatprep.mubr.f32.mxu0 0.0
  %262 = vmatmul.mubr.f32.gmra.mrb[0].mxu0 %v113
  %v263 = vpop.f32.mrb[0].mxu0
  %v264 = vadd.f32 0.0, %v263
  %v265 = vpop.f32.mrb[0].mxu0
  %266 = vmatprep.mubr.f32.mxu0 0.0
  %267 = vmatmul.mubr.f32.gmra.mrb[0].mxu0 %v114
  %v268 = vpop.f32.mrb[0].mxu0
  %v269 = vadd.f32 0.0, %v268
  %v270 = vpop.f32.mrb[0].mxu0
  %271 = vmatprep.mubr.f32.mxu0 0.0
  %272 = vmatmul.mubr.f32.gmra.mrb[0].mxu0 %v115
  %v273 = vpop.f32.mrb[0].mxu0
  %v274 = vadd.f32 0.0, %v273
  %v275 = vpop.f32.mrb[0].mxu0
  %276 = vmatprep.mubr.f32.mxu0 0.0
  %277 = vmatmul.mubr.f32.gmra.mrb[0].mxu0 %v116
  %v278 = vpop.f32.mrb[0].mxu0
  %v279 = vadd.f32 0.0, %v278
  %v280 = vpop.f32.mrb[0].mxu0
  %281 = vmatprep.mubr.f32.mxu0 0.0
  %282 = vmatmul.mubr.f32.gmra.mrb[0].mxu0 %v117
  %v283 = vpop.f32.mrb[0].mxu0
  %v284 = vadd.f32 0.0, %v283
  %v285 = vpop.f32.mrb[0].mxu0
  %286 = vmatprep.mubr.f32.mxu0 0.0
  %287 = vmatmul.mubr.f32.gmra.mrb[0].mxu0 %v118
  %v288 = vpop.f32.mrb[0].mxu0
  %v289 = vadd.f32 0.0, %v288
  %v290 = vpop.f32.mrb[0].mxu0
  %291 = vmatprep.mubr.f32.mxu0 0.0
  %292 = vmatmul.mubr.f32.gmra.mrb[0].mxu0 %v119
  %v293 = vpop.f32.mrb[0].mxu0
  %v294 = vadd.f32 0.0, %v293
  %v295 = vpop.f32.mrb[0].mxu0
  %296 = vdwg.mxu0
  %v297 = vadd.f32 %v120, %v219
  %v298 = vadd.f32 %v121, %v224
  %v299 = vadd.f32 %v122, %v229
  %v300 = vadd.f32 %v123, %v234
  %v301 = vadd.f32 %v124, %v239
  %v302 = vadd.f32 %v125, %v244
  %v303 = vadd.f32 %v126, %v249
  %v304 = vadd.f32 %v127, %v254
  %v305 = vadd.f32 %v128, %v259
  %v306 = vadd.f32 %v129, %v264
  %v307 = vadd.f32 %v130, %v269
  %v308 = vadd.f32 %v131, %v274
  %v309 = vadd.f32 %v132, %v279
  %v310 = vadd.f32 %v133, %v284
  %v311 = vadd.f32 %v134, %v289
  %v312 = vadd.f32 %v135, %v294
  %vm313 = vcmask 23552
  %314 = vst.msk [vmem:[%s2] sm:$0xff] %vm313, %v297
  %315 = vst.msk [vmem:[%s2 + $0x8] sm:$0xff] %vm313, %v298
  %316 = vst.msk [vmem:[%s2 + $0x10] sm:$0xff] %vm313, %v299
  %317 = vst.msk [vmem:[%s2 + $0x18] sm:$0xff] %vm313, %v300
  %318 = vst.msk [vmem:[%s2 + $0x20] sm:$0xff] %vm313, %v301
  %319 = vst.msk [vmem:[%s2 + $0x28] sm:$0xff] %vm313, %v302
  %320 = vst.msk [vmem:[%s2 + $0x30] sm:$0xff] %vm313, %v303
  %321 = vst.msk [vmem:[%s2 + $0x38] sm:$0xff] %vm313, %v304
  %322 = vst.msk [vmem:[%s2 + $0x40] sm:$0xff] %vm313, %v305
  %323 = vst.msk [vmem:[%s2 + $0x48] sm:$0xff] %vm313, %v306
  %324 = vst.msk [vmem:[%s2 + $0x50] sm:$0xff] %vm313, %v307
  %325 = vst.msk [vmem:[%s2 + $0x58] sm:$0xff] %vm313, %v308
  %326 = vst.msk [vmem:[%s2 + $0x60] sm:$0xff] %vm313, %v309
  %327 = vst.msk [vmem:[%s2 + $0x68] sm:$0xff] %vm313, %v310
  %328 = vst.msk [vmem:[%s2 + $0x70] sm:$0xff] %vm313, %v311
  %329 = vst.msk [vmem:[%s2 + $0x78] sm:$0xff] %vm313, %v312
  // Predicated region
  $region14: #{_device_forward.5} parent=0 // pred_check
    _
  $region15: #{_device_forward.5} parent=0 // pred_check_branch
    %331 = sbr.rel (0) target = $region17
  $region16: #{_device_forward.5} parent=0 // pred_region
    _
  $region17: #{_device_forward.5} parent=0 // pred_fallthru
    _
  // Predicated region
  $region18: #{_device_forward.5} parent=0 // pred_check
    _
  $region19: #{_device_forward.5} parent=0 // pred_check_branch
    %333 = sbr.rel (0) target = $region21
  $region20: #{_device_forward.5} parent=0 // pred_region
    _
  $region21: #{_device_forward.5} parent=0 // pred_fallthru
    _

</llo_original>
